<compile_context>
chip_gen: v5e
topology: v5e:2x2
jax: 0.10.0
libtpu: 0.0.40
codegen_flags: <defaults>
</compile_context>

<pallas_src>
import functools

import jax
import jax.numpy as jnp
from jax import lax
from jax.experimental import pallas as pl
from jax.experimental.pallas import tpu as pltpu


def _head_kernel(x_ref, w_ref, o_ref, *, scale, compute_dtype):
    """One grid step == `b_blk` batch elements. All tiles live fully in VMEM."""
    b_blk, T, C = x_ref.shape
    H = o_ref.shape[-1]

    # --- Fused QKV projection: one MXU matmul with M = b_blk*T rows, N = 3H cols.
    #     x_ref / w_ref already arrive in compute_dtype (cast in the wrapper).
    x2d = x_ref[...].reshape(b_blk * T, C)                            # (b_blk*T, C)
    kqv = jnp.dot(x2d, w_ref[...], preferred_element_type=jnp.float32)
    kqv = kqv.reshape(b_blk, T, 3 * H)                                # f32

    k = kqv[:, :, 0:H]                       # (b_blk, T, H) f32
    q = kqv[:, :, H:2 * H] * scale           # fold softmax scale into q: T*H muls
    v = kqv[:, :, 2 * H:3 * H]

    # --- Attention scores (batched matmul on the MXU), accumulated in f32.
    wei = jnp.einsum(
        "bqh,bkh->bqk",
        q.astype(compute_dtype), k.astype(compute_dtype),
        preferred_element_type=jnp.float32,
    )                                                                  # (b_blk, T, T)

    # --- Softmax with the causal mask applied AFTER exp (zeroing).
    #     Using the row max over all (incl. masked) scores is still numerically
    #     stable (it only shrinks every exp); masked terms are then zeroed so
    #     they never enter the sum. This removes the -inf select pass and its
    #     extra (T,T) f32 temporary.
    row = lax.broadcasted_iota(jnp.int32, (T, T), 0)
    col = lax.broadcasted_iota(jnp.int32, (T, T), 1)
    causal = (col <= row)[None, :, :]

    m = jnp.max(wei, axis=-1, keepdims=True)
    p = jnp.where(causal, jnp.exp(wei - m), 0.0)                       # (b_blk, T, T)
    denom = jnp.sum(p, axis=-1, keepdims=True)                         # (b_blk, T, 1)

    # --- Weighted sum of values with UN-normalized probabilities; normalize
    #     afterwards with an exact O(T) reciprocal broadcast over H (this was
    #     previously an approx reciprocal over the full (T,T) matrix — both the
    #     f32-parity bug and an O(T^2) VPU pass).
    out_un = jnp.einsum(
        "bqk,bkh->bqh",
        p.astype(compute_dtype), v.astype(compute_dtype),
        preferred_element_type=jnp.float32,
    )                                                                  # (b_blk, T, H)
    o_ref[...] = (out_un * (1.0 / denom)).astype(o_ref.dtype)


def _pick_batch_block(B, T, C, H, itemsize):
    """Batch elements per grid step.

    Prefer enough rows (b_blk*T) to fill MXU sublanes and amortize the ~0.35us
    per-step grid overhead, while (a) keeping the per-step working set well under
    scoped VMEM on every generation and (b) keeping grid >= 2 whenever B >= 2 so
    both v7x TensorCores have work."""
    # Per-batch f32 working set: ~3 simultaneous (T,T) f32 temporaries
    # (scores, exp/probs, transient), kqv (T,3H) + out (T,H) accum in f32,
    # plus the double-buffered x and out pipeline tiles in compute dtype.
    per_batch_bytes = (3 * T * T * 4) + (4 * T * H * 4) + (2 * T * (C + H) * itemsize)
    budget = 24 << 20                                    # conservative for v7x
    vmem_cap = max(1, budget // per_batch_bytes)

    divisors = [d for d in range(1, B + 1) if B % d == 0 and d <= vmem_cap]
    if not divisors:
        divisors = [1]

    if B >= 2:
        # Keep at least 2 grid steps so dimension_semantics=("parallel",) can
        # shard across v7x's two TensorCores.
        two_core = [d for d in divisors if B // d >= 2]
        if two_core:
            divisors = two_core

    for d in divisors:
        if d * T >= 512:                                 # enough MXU rows; stop growing
            return d
    return divisors[-1]                                  # biggest block that fits


def _vmem_limit_bytes():
    """Generation-aware scoped-VMEM limit: lift v5e's 16 MiB default, stay well
    under v7x's 64 MiB physical VMEM."""
    try:
        cap = pltpu.get_tpu_info().vmem_capacity_bytes
    except Exception:
        cap = None
    if cap is not None and cap >= (100 << 20):           # v5e / v6e: 128 MiB physical
        return 80 << 20
    return 48 << 20                                      # v7x (64 MiB) or unknown


def head_forward(x, wk, wq, wv, *, compute_dtype=jnp.float32):
    """x: (B, T, C); wk/wq/wv: (C, H) pre-transposed nn.Linear weights.

    compute_dtype: dtype of the MXU operands (accumulation is always f32).
    jnp.bfloat16 is recommended on v5e, v6e and v7x: the MXU is bf16-native and
    casting in the wrapper halves HBM->VMEM DMA bytes; f32 keeps bit-close parity
    with the PyTorch module.
    """
    B, T, C = x.shape
    H = wk.shape[1]
    scale = float(C) ** (-0.5)          # matches the PyTorch code: C**-0.5, not H**-0.5
    out_dtype = x.dtype

    # Fuse the three projections into one weight (done once, outside the kernel).
    w_kqv = jnp.concatenate([wk, wq, wv], axis=1)            # (C, 3H)

    # Cast operands BEFORE the pallas_call so the DMA (and the double-buffer
    # footprint) shrinks with compute_dtype; the kernel never re-casts them.
    if x.dtype != compute_dtype:
        x = x.astype(compute_dtype)
    if w_kqv.dtype != compute_dtype:
        w_kqv = w_kqv.astype(compute_dtype)

    itemsize = jnp.dtype(compute_dtype).itemsize
    b_blk = _pick_batch_block(B, T, C, H, itemsize)
    grid = (B // b_blk,)

    kernel = functools.partial(_head_kernel, scale=scale, compute_dtype=compute_dtype)

    cost = pl.CostEstimate(
        flops=2 * B * (3 * T * C * H + 2 * T * T * H),
        transcendentals=B * T * T,
        bytes_accessed=(x.size + w_kqv.size) * itemsize
        + B * T * H * jnp.dtype(out_dtype).itemsize,
    )

    return pl.pallas_call(
        kernel,
        out_shape=jax.ShapeDtypeStruct((B, T, H), out_dtype),
        grid_spec=pltpu.PrefetchScalarGridSpec(
            num_scalar_prefetch=0,
            grid=grid,
            in_specs=[
                pl.BlockSpec((b_blk, T, C), lambda b: (b, 0, 0)),
                pl.BlockSpec((C, 3 * H), lambda b: (0, 0)),   # weights stay VMEM-resident
            ],
            out_specs=pl.BlockSpec((b_blk, T, H), lambda b: (b, 0, 0)),
        ),
        compiler_params=pltpu.CompilerParams(
            dimension_semantics=("parallel",),
            vmem_limit_bytes=_vmem_limit_bytes(),
        ),
        cost_estimate=cost,
    )(x, w_kqv)


def head_reference(x, wk, wq, wv):
    """Pure-JAX reference matching the PyTorch forward (eval mode)."""
    B, T, C = x.shape
    k = x @ wk
    q = x @ wq
    v = x @ wv
    wei = jnp.einsum("btd,bsd->bts", q, k) * (C ** -0.5)
    tril = jnp.tril(jnp.ones((T, T), dtype=bool))
    wei = jnp.where(tril[None, :, :], wei, -jnp.inf)
    wei = jax.nn.softmax(wei, axis=-1)
    return wei @ v


if __name__ == "__main__":
    # Small shapes consistent with the module's forward: (B, T, C) with C = n_embd.
    B, T, C = 2, 16, 32        # scaled-down block_size / n_embd for a quick test
    head_size = 16

    key = jax.random.PRNGKey(0)
    kx, kk, kq, kv = jax.random.split(key, 4)

    x = jax.random.normal(kx, (B, T, C), dtype=jnp.float32)

    # Deterministic "nn.Linear(n_embd, head_size, bias=False)" weights,
    # stored pre-transposed as (C, head_size).
    bound = 1.0 / (C ** 0.5)
    wk = jax.random.uniform(kk, (C, head_size), jnp.float32, -bound, bound)
    wq = jax.random.uniform(kq, (C, head_size), jnp.float32, -bound, bound)
    wv = jax.random.uniform(kv, (C, head_size), jnp.float32, -bound, bound)

    ref = head_reference(x, wk, wq, wv)

    # f32 MXU path: close parity with the PyTorch module.
    out = jax.block_until_ready(head_forward(x, wk, wq, wv))
    assert out.shape == (B, T, head_size)
    assert jnp.allclose(out, ref, atol=1e-4, rtol=1e-4), "f32 kernel mismatch vs reference"

    # bf16 MXU-operand path (fast path on all generations): f32 accumulation,
    # looser tolerance for the bf16 operand rounding.
    out_bf16 = jax.block_until_ready(
        head_forward(x, wk, wq, wv, compute_dtype=jnp.bfloat16))
    assert out_bf16.shape == (B, T, head_size)
    assert jnp.allclose(out_bf16, ref, atol=5e-2, rtol=5e-2), "bf16 kernel mismatch vs reference"

    print("KERNEL_OK")
</pallas_src>

<mosaic_0001>
module attributes {stable_mosaic.version = 11 : i64} {
  func.func @_head_kernel(%arg0: i32, %arg1: memref<1x16x32xf32, #tpu.memory_space<vmem>>, %arg2: memref<32x48xf32, #tpu.memory_space<vmem>>, %arg3: memref<1x16x16xf32, #tpu.memory_space<vmem>>) attributes {dimension_semantics = [#tpu.dimension_semantics<parallel>], iteration_bounds = array<i64: 2>, scalar_prefetch = 0 : i64, scratch_operands = 0 : i64, tpu.core_type = #tpu.core_type<tc>, window_params = [{transform_indices = @transform_0, window_bounds = array<i64: 1, 16, 32>}, {pipeline_mode = #tpu.pipeline_mode<synchronous>, transform_indices = @transform_1, window_bounds = array<i64: 32, 48>}, {transform_indices = @transform_2, window_bounds = array<i64: 1, 16, 16>}]} {
    %c0 = arith.constant 0 : index
    %c0_0 = arith.constant 0 : index
    %c0_1 = arith.constant 0 : index
    %0 = vector.load %arg1[%c0, %c0_0, %c0_1] : memref<1x16x32xf32, #tpu.memory_space<vmem>>, vector<1x16x32xf32>
    %1 = vector.shape_cast %0 : vector<1x16x32xf32> to vector<16x32xf32>
    %c0_2 = arith.constant 0 : index
    %c0_3 = arith.constant 0 : index
    %2 = vector.load %arg2[%c0_2, %c0_3] : memref<32x48xf32, #tpu.memory_space<vmem>>, vector<32x48xf32>
    %cst = arith.constant dense<0.000000e+00> : vector<16x48xf32>
    %3 = tpu.matmul %1, %2, %cst {dimension_numbers = #tpu.dot_dimension_numbers<[1], [0], [0], [1], [0, 0, 1, 1], [], []>} : vector<16x32xf32>, vector<32x48xf32>, vector<16x48xf32> -> vector<16x48xf32>
    %4 = vector.shape_cast %3 : vector<16x48xf32> to vector<1x16x48xf32>
    %5 = vector.extract_strided_slice %4 {offsets = [0, 0, 0], sizes = [1, 16, 16], strides = [1, 1, 1]} : vector<1x16x48xf32> to vector<1x16x16xf32>
    %6 = vector.extract_strided_slice %4 {offsets = [0, 0, 16], sizes = [1, 16, 16], strides = [1, 1, 1]} : vector<1x16x48xf32> to vector<1x16x16xf32>
    %cst_4 = arith.constant 0.176776692 : f32
    %7 = vector.broadcast %cst_4 : f32 to vector<1x16x16xf32>
    %8 = arith.mulf %6, %7 : vector<1x16x16xf32>
    %9 = vector.extract_strided_slice %4 {offsets = [0, 0, 32], sizes = [1, 16, 16], strides = [1, 1, 1]} : vector<1x16x48xf32> to vector<1x16x16xf32>
    "tpu.trace_start"() <{level = 10 : i32, message = "bqh,bkh->bqk"}> : () -> ()
    %cst_5 = arith.constant dense<0.000000e+00> : vector<1x16x16xf32>
    %10 = tpu.matmul %8, %5, %cst_5 {dimension_numbers = #tpu.dot_dimension_numbers<[2], [2], [1], [1], [0, 0, 0, 1, 1, 1], [0], [0]>} : vector<1x16x16xf32>, vector<1x16x16xf32>, vector<1x16x16xf32> -> vector<1x16x16xf32>
    "tpu.trace_stop"() : () -> ()
    %11 = tpu.iota {dimensions = array<i32: 0>} : vector<16x16xi32>
    %12 = tpu.iota {dimensions = array<i32: 1>} : vector<16x16xi32>
    %13 = arith.cmpi sle, %12, %11 : vector<16x16xi32>
    %14 = vector.shape_cast %13 : vector<16x16xi1> to vector<1x16x16xi1>
    %cst_6 = arith.constant dense<0xFF800000> : vector<1x16xf32>
    %15 = vector.multi_reduction <maximumf>, %10, %cst_6 [2] : vector<1x16x16xf32> to vector<1x16xf32>
    %16 = vector.shape_cast %15 : vector<1x16xf32> to vector<1x16x1xf32>
    %17 = vector.broadcast %16 : vector<1x16x1xf32> to vector<1x16x16xf32>
    %18 = arith.subf %10, %17 : vector<1x16x16xf32>
    %19 = math.exp %18 : vector<1x16x16xf32>
    %cst_7 = arith.constant 0.000000e+00 : f32
    %20 = vector.broadcast %cst_7 : f32 to vector<1x16x16xf32>
    %21 = arith.select %14, %19, %20 : vector<1x16x16xi1>, vector<1x16x16xf32>
    %cst_8 = arith.constant dense<0.000000e+00> : vector<1x16xf32>
    %22 = vector.multi_reduction <add>, %21, %cst_8 [2] : vector<1x16x16xf32> to vector<1x16xf32>
    %23 = vector.shape_cast %22 : vector<1x16xf32> to vector<1x16x1xf32>
    "tpu.trace_start"() <{level = 10 : i32, message = "bqk,bkh->bqh"}> : () -> ()
    %cst_9 = arith.constant dense<0.000000e+00> : vector<1x16x16xf32>
    %24 = tpu.matmul %21, %9, %cst_9 {dimension_numbers = #tpu.dot_dimension_numbers<[2], [1], [1], [2], [0, 0, 0, 1, 1, 2], [0], [0]>} : vector<1x16x16xf32>, vector<1x16x16xf32>, vector<1x16x16xf32> -> vector<1x16x16xf32>
    "tpu.trace_stop"() : () -> ()
    %cst_10 = arith.constant 1.000000e+00 : f32
    %25 = vector.broadcast %cst_10 : f32 to vector<1x16x1xf32>
    %26 = arith.divf %25, %23 : vector<1x16x1xf32>
    %27 = vector.broadcast %26 : vector<1x16x1xf32> to vector<1x16x16xf32>
    %28 = arith.mulf %24, %27 : vector<1x16x16xf32>
    %c0_11 = arith.constant 0 : index
    %c0_12 = arith.constant 0 : index
    %c0_13 = arith.constant 0 : index
    %29 = vector.load %arg3[%c0_11, %c0_12, %c0_13] : memref<1x16x16xf32, #tpu.memory_space<vmem>>, vector<1x16x16xf32>
    tpu.vector_store %arg3[%c0_11, %c0_12, %c0_13], %28 {strides = array<i32>} : memref<1x16x16xf32, #tpu.memory_space<vmem>>, vector<1x16x16xf32>,
    return
  }
  func.func @transform_0(%arg0: i32) -> (i32, i32, i32) {
    %c0_i32 = arith.constant 0 : i32
    %c0_i32_0 = arith.constant 0 : i32
    %c0_i32_1 = arith.constant 0 : i32
    return %arg0, %c0_i32, %c0_i32_0 : i32, i32, i32
  }
  func.func @transform_1(%arg0: i32) -> (i32, i32) {
    %c0_i32 = arith.constant 0 : i32
    %c0_i32_0 = arith.constant 0 : i32
    %c0_i32_1 = arith.constant 0 : i32
    return %c0_i32, %c0_i32_0 : i32, i32
  }
  func.func @transform_2(%arg0: i32) -> (i32, i32, i32) {
    %c0_i32 = arith.constant 0 : i32
    %c0_i32_0 = arith.constant 0 : i32
    %c0_i32_1 = arith.constant 0 : i32
    return %arg0, %c0_i32, %c0_i32_0 : i32, i32, i32
  }
}

</mosaic_0001>

<llo_original>
// kernel: tpu_custom_call.1
$region0: #{tpu_custom_call.1}
  #allocation0 [shape = 'u32[]', space=smem, size = 0x4, offset = 0x4, fixed_abs, tag = 'smem constant byte address 0x4 - core index']
  #allocation1 [shape = 'u32[72,128]{1,0:T(1,128)}', space=vmem, size = 0x9000, scoped, tag = 'internal scratch']
  %s0 = inlined_call_operand.hbm [shape: f32[2,16,32], index: 0, kind: input, shape index: {}]
  %s1 = inlined_call_operand.hbm [shape: f32[32,48], index: 1, kind: input, shape index: {}]
  %s2 = inlined_call_operand.hbm [shape: f32[2,16,16], index: 2, kind: output, shape index: {}]
  %s3 = sld [smem:[#allocation0]]
  $region49: #{tpu_custom_call.1} parent=0
    _
  %s5 = ssub.s32 1, %s3
  %s6 = scalar_select 0, %s5, %s3
  $region1: #{tpu_custom_call.1} parent=0
    #allocation2 [shape = 'u8[16384]{0}', space=vmem, size = 0x4000, scoped, tag = 'input window, operand 0']
    #allocation3 [shape = 's32[2]{0}', space=sflag, size = 0x8, scoped, tag = 'scoped memory for tpu_custom_call.1']
    #allocation4 [shape = 's32[2]{0}', space=sflag, size = 0x8, scoped, tag = 'scoped memory for tpu_custom_call.1']
    #allocation5 [shape = 'u8[16384]{0}', space=vmem, size = 0x4000, scoped, tag = 'input window, operand 1, single buffered']
    #allocation6 [shape = 's32[1]{0}', space=sflag, size = 0x4, scoped, tag = 'scoped memory for tpu_custom_call.1']
    #allocation7 [shape = 'u8[16384]{0}', space=vmem, size = 0x4000, scoped, tag = 'output window, operand 0']
    %7 = vsyncpa [#allocation3], 0
    %s8 = scalar_lea.sflag [#allocation3], 1
    %9 = vsyncpa %s8, 0
    %10 = vsyncpa [#allocation6], 0
    %11 = vsyncpa [#allocation4], 0
    %s12 = scalar_lea.sflag [#allocation4], 1
    %13 = vsyncpa %s12, 0
    loop: start=0, step=1, limit=4
    $region2: #{tpu_custom_call.1} parent=1 // loop_pre_header
      _
    $region3: #{tpu_custom_call.1} parent=1 // loop_header
      %s15 = sphi 0, %s19
      %p16 = scmp.ge.s32.totalorder %s15, 4
      %s25 = sphi 0, %s27
      %s28 = sphi 0, %s25
      %s29 = sphi 0, %s28
      %s45 = sphi 0, %s29
      %s49 = sphi 0, %s49
      %s51 = sphi 0, %s49
      %s52 = sphi 0, %s51
      %s66 = sphi 0, %s52
      %s72 = sphi 0, %s74
      %s75 = sphi 0, %s72
      %s76 = sphi 0, %s75
      %s92 = sphi 0, %s76
    $region4: #{tpu_custom_call.1} parent=1 // loop_header_branch
      %18 = sbr.rel (%p16) target = $region8
    $region5: #{tpu_custom_call.1} parent=1 // loop_body
      %s20 = ssub.s32 %s15, 1
      %s21 = ssub.s32 %s15, 2
      %s22 = sadd.s32 %s15, 1
      %s23 = ssub.s32 %s15, %s22
      %p24 = scmp.eq.s32.totalorder %s23, 0
      %s26 = sadd.s32 %s25, 1
      %s27 = scalar_select %p24, %s25, %s26
      %p30 = pneg %p24
      %p31 = scmp.eq.s32.totalorder %s15, 1
      %p32 = por %p30, %p31
      %p33 = scmp.ne.s32.totalorder %s25, %s28
      %p34 = scmp.eq.s32.totalorder %s15, 0
      %p35 = por %p33, %p34
      %p36 = scmp.ne.s32.totalorder %s25, %s28
      %p37 = scmp.eq.s32.totalorder %s20, 1
      %p38 = por %p36, %p37
      %p39 = scmp.ne.s32.totalorder %s28, %s29
      %p40 = scmp.eq.s32.totalorder %s20, 0
      %p41 = por %p39, %p40
      %p42 = scmp.ne.s32.totalorder %s28, %s29
      %p43 = scmp.eq.s32.totalorder %s21, 1
      %p44 = por %p42, %p43
      %p46 = scmp.ne.s32.totalorder %s29, %s45
      %p47 = scmp.eq.s32.totalorder %s21, 0
      %p48 = por %p46, %p47
      %s50 = sadd.s32 %s49, 1
      %p53 = scmp.eq.s32.totalorder %s15, 1
      %p54 = scmp.ne.s32.totalorder %s49, %s51
      %p55 = scmp.eq.s32.totalorder %s15, 0
      %p56 = por %p54, %p55
      %p57 = scmp.ne.s32.totalorder %s49, %s51
      %p58 = scmp.eq.s32.totalorder %s20, 1
      %p59 = por %p57, %p58
      %p60 = scmp.ne.s32.totalorder %s51, %s52
      %p61 = scmp.eq.s32.totalorder %s20, 0
      %p62 = por %p60, %p61
      %p63 = scmp.ne.s32.totalorder %s51, %s52
      %p64 = scmp.eq.s32.totalorder %s21, 1
      %p65 = por %p63, %p64
      %p67 = scmp.ne.s32.totalorder %s52, %s66
      %p68 = scmp.eq.s32.totalorder %s21, 0
      %p69 = por %p67, %p68
      %s70 = ssub.s32 %s15, %s22
      %p71 = scmp.eq.s32.totalorder %s70, 0
      %s73 = sadd.s32 %s72, 1
      %s74 = scalar_select %p71, %s72, %s73
      %p77 = pneg %p71
      %p78 = scmp.eq.s32.totalorder %s15, 1
      %p79 = por %p77, %p78
      %p80 = scmp.ne.s32.totalorder %s72, %s75
      %p81 = scmp.eq.s32.totalorder %s15, 0
      %p82 = por %p80, %p81
      %p83 = scmp.ne.s32.totalorder %s72, %s75
      %p84 = scmp.eq.s32.totalorder %s20, 1
      %p85 = por %p83, %p84
      %p86 = scmp.ne.s32.totalorder %s75, %s76
      %p87 = scmp.eq.s32.totalorder %s20, 0
      %p88 = por %p86, %p87
      %p89 = scmp.ne.s32.totalorder %s75, %s76
      %p90 = scmp.eq.s32.totalorder %s21, 1
      %p91 = por %p89, %p90
      %p93 = scmp.ne.s32.totalorder %s76, %s92
      %p94 = scmp.eq.s32.totalorder %s21, 0
      %p95 = por %p93, %p94
      %p96 = scmp.le.s32.totalorder 1, %s15
      %p97 = scmp.lt.s32.totalorder %s15, 3
      %p98 = pnand %p96, %p97
      %p99 = pneg %p98
      // Predicated region
      $region9: #{tpu_custom_call.1} parent=5 // pred_check
        _
      $region10: #{tpu_custom_call.1} parent=5 // pred_check_branch
        %101 = sbr.rel (%p98) target = $region12
      $region11: #{tpu_custom_call.1} parent=5 // pred_region
        %s102 = ssub.s32 %s15, 1
        // Predicated region
        $region13: #{tpu_custom_call.1} parent=11 // pred_check
          %p103 = pneg %p62
        $region14: #{tpu_custom_call.1} parent=11 // pred_check_branch
          %105 = sbr.rel (%p103) target = $region16
        $region15: #{tpu_custom_call.1} parent=11 // pred_region
          %107 = vsyncadd [#allocation6], 0
          %s108 = sshll.u32 %s1, 4
          %s109 = int_to_ptr.hbm [resolvable:$true] %s108
          %s110 = sshll.u32 [#allocation5], 4
          %s111 = int_to_ptr.vmem [resolvable:$true] %s110
          %116 = dma.hbm_to_vmem [thread:$0]  %s109, 512, %s111, [#allocation6], 128, 128, 8
        $region16: #{tpu_custom_call.1} parent=11 // pred_fallthru
          _
      $region12: #{tpu_custom_call.1} parent=5 // pred_fallthru
        _
      %p117 = scmp.lt.s32.totalorder %s15, 2
      // Predicated region
      $region17: #{tpu_custom_call.1} parent=5 // pred_check
        %p118 = pneg %p117
      $region18: #{tpu_custom_call.1} parent=5 // pred_check_branch
        %120 = sbr.rel (%p118) target = $region20
      $region19: #{tpu_custom_call.1} parent=5 // pred_region
        // Predicated region
        $region21: #{tpu_custom_call.1} parent=19 // pred_check
          %p121 = pneg %p35
        $region22: #{tpu_custom_call.1} parent=19 // pred_check_branch
          %123 = sbr.rel (%p121) target = $region24
        $region23: #{tpu_custom_call.1} parent=19 // pred_region
          %s124 = sand.u32 %s25, 1
          %s125 = scalar_lea.sflag [#allocation3], %s124
          %s126 = sand.u32 %s25, 1
          %s127 = smul.addr %s126, 16
          %s128 = scalar_lea.vmem [#allocation2], %s127
          %130 = vsyncadd %s125, 0
          %s131 = smul.addr %s15, 2
          %s132 = smul.addr %s131, 8
          %s133 = scalar_lea.hbm %s0, %s132
          %s134 = sshll.u32 %s133, 4
          %s135 = int_to_ptr.hbm [resolvable:$true] %s134
          %s136 = sshll.u32 %s128, 4
          %s137 = int_to_ptr.vmem [resolvable:$true] %s136
          %142 = dma.hbm_to_vmem [thread:$0]  %s135, 256, %s137, %s125, 128, 128, 8
        $region24: #{tpu_custom_call.1} parent=19 // pred_fallthru
          _
      $region20: #{tpu_custom_call.1} parent=5 // pred_fallthru
        _
      %p143 = scmp.le.s32.totalorder 1, %s15
      %p144 = scmp.lt.s32.totalorder %s15, 3
      %p145 = pnand %p143, %p144
      %p146 = pneg %p145
      // Predicated region
      $region25: #{tpu_custom_call.1} parent=5 // pred_check
        _
      $region26: #{tpu_custom_call.1} parent=5 // pred_check_branch
        %148 = sbr.rel (%p145) target = $region28
      $region27: #{tpu_custom_call.1} parent=5 // pred_region
        %s149 = ssub.s32 %s15, 1
        %s150 = sand.u32 %s28, 1
        %s151 = scalar_lea.sflag [#allocation3], %s150
        %s152 = sand.u32 %s28, 1
        %s153 = smul.addr %s152, 16
        %s154 = scalar_lea.vmem [#allocation2], %s153
        // Predicated region
        $region29: #{tpu_custom_call.1} parent=27 // pred_check
          %p155 = pneg %p41
        $region30: #{tpu_custom_call.1} parent=27 // pred_check_branch
          %157 = sbr.rel (%p155) target = $region32
        $region31: #{tpu_custom_call.1} parent=27 // pred_region
          %159 = dma.done %s151, 256
        $region32: #{tpu_custom_call.1} parent=27 // pred_fallthru
          _
        // Predicated region
        $region33: #{tpu_custom_call.1} parent=27 // pred_check
          %p160 = pneg %p62
        $region34: #{tpu_custom_call.1} parent=27 // pred_check_branch
          %162 = sbr.rel (%p160) target = $region36
        $region35: #{tpu_custom_call.1} parent=27 // pred_region
          %164 = dma.done [#allocation6], 512
        $region36: #{tpu_custom_call.1} parent=27 // pred_fallthru
          _
        %s165 = sand.u32 %s28, 1
        %s166 = scalar_lea.sflag [#allocation3], %s165
        %s167 = sand.u32 %s28, 1
        %s168 = smul.addr %s167, 16
        %s169 = scalar_lea.vmem [#allocation2], %s168
        %p170 = pneg %p41
        %p171 = pneg %p38
        %p172 = pneg %p62
        %p173 = pneg %p59
        %p174 = pneg %p88
        %p175 = pneg %p85
        %s176 = sand.u32 %s75, 1
        %s177 = scalar_lea.sflag [#allocation4], %s176
        %s178 = sand.u32 %s75, 1
        %s179 = smul.addr %s178, 16
        %s180 = scalar_lea.vmem [#allocation7], %s179
        %v181 = vld [vmem:[%s154] sm:$0xff]
        %v182 = vld [vmem:[%s154 + $0x8] sm:$0xff]
        %v183 = vld [vmem:[#allocation5] sm:$0xff]
        %v184 = vld [vmem:[#allocation5 + $0x8] sm:$0xff]
        %v185 = vld [vmem:[#allocation5 + $0x10] sm:$0xff]
        %v186 = vld [vmem:[#allocation5 + $0x18] sm:$0xff]
        %vm187 = vcmask 261120
        %v189 = vsel %vm187, %v181, 0
        %v192 = vsel %vm187, %v182, 0
        %194 = vmatpush.msra.mxu0 0.0
        %195 = vmatpush.msra.mxu0 0.0
        %196 = vmatpush.msra.mxu0 0.0
        %197 = vmatpush.msra.mxu0 0.0
        %198 = vmatpush.msra.mxu0 0.0
        %199 = vmatpush.msra.mxu0 0.0
        %200 = vmatpush.msra.mxu0 0.0
        %201 = vmatpush.msra.mxu0 0.0
        %202 = vmatpush.msra.mxu0 0.0
        %203 = vmatpush.msra.mxu0 0.0
        %204 = vmatpush.msra.mxu0 0.0
        %205 = vmatpush.msra.mxu0 0.0
        %206 = vmatpush.msra.mxu0 %v186
        %207 = vmatpush.msra.mxu0 %v185
        %208 = vmatpush.msra.mxu0 %v184
        %209 = vmatpush.msra.mxu0 %v183
        %210 = vmatmul.f32.gmra.mxu0 %v189
        %v211 = vpop.f32.mrf.mxu0
        %v212 = vadd.f32 0.0, %v211
        %213 = vmatmul.f32.gmra.mxu0 %v192
        %v214 = vpop.f32.mrf.mxu0
        %v215 = vadd.f32 0.0, %v214
        %216 = vdwg.mxu0
        %v217 = vmul.f32 %v212, 0.17677669
        %v218 = vmul.f32 %v215, 0.17677669
        %221 = vrot.lane.b32.xlu0 %v217, 112
        %v222 = vpop.permute.xlu0 %221
        %223 = vrot.lane.b32.xlu0 %v218, 112
        %v224 = vpop.permute.xlu0 %223
        %vm225 = vcmask 130048
        %v226 = vsel %vm225, %v222, 0
        %v228 = vsel %vm225, %v224, 0
        %v231 = vsel %vm225, %v212, 0
        %v234 = vsel %vm225, %v215, 0
        %236 = vmatpush.xpose.msra.mxu0 0.0
        %237 = vmatpush.xpose.msra.mxu0 0.0
        %238 = vmatpush.xpose.msra.mxu0 0.0
        %239 = vmatpush.xpose.msra.mxu0 0.0
        %240 = vmatpush.xpose.msra.mxu0 0.0
        %241 = vmatpush.xpose.msra.mxu0 0.0
        %242 = vmatpush.xpose.msra.mxu0 0.0
        %243 = vmatpush.xpose.msra.mxu0 0.0
        %244 = vmatpush.xpose.msra.mxu0 0.0
        %245 = vmatpush.xpose.msra.mxu0 0.0
        %246 = vmatpush.xpose.msra.mxu0 0.0
        %247 = vmatpush.xpose.msra.mxu0 0.0
        %248 = vmatpush.xpose.msra.mxu0 0.0
        %249 = vmatpush.xpose.msra.mxu0 0.0
        %250 = vmatpush.xpose.msra.mxu0 %v234
        %251 = vmatpush.xpose.msra.mxu0 %v231
        %252 = vmatmul.f32.gmra.mxu0 %v226
        %v253 = vpop.f32.mrf.mxu0
        %v254 = vadd.f32 0.0, %v253
        %255 = vmatmul.f32.gmra.mxu0 %v228
        %v256 = vpop.f32.mrf.mxu0
        %v257 = vadd.f32 0.0, %v256
        %258 = vdwg.mxu0
        %v259 = vlaneseq
        %v260 = vshrl.u32 %v259, 7
        %v261 = vadd.s32 %v260, 8
        %v262 = vlaneseq
        %v263 = vand.u32 %v262, 127
        %vm264 = vcmp.le.s32.totalorder %v263, %v260
        %vm265 = vcmp.le.s32.totalorder %v263, %v261
        %v266 = vsel %vm225, %v254, -inf
        %267 = vmax.xlane.f32.xlu0 %v266
        %v268 = vpop.xlane.xlu0 %267
        %v269 = vsel %vm225, %v257, -inf
        %270 = vmax.xlane.f32.xlu0 %v269
        %v271 = vpop.xlane.xlu0 %270
        %v272 = vsub.f32 %v254, %v268
        %v273 = vsub.f32 %v257, %v271
        %v274 = vmul.f32 %v272, 1.442695
        %v275 = vpow.pop %v274
        %v276 = vmul.f32 %v273, 1.442695
        %v277 = vpow.pop %v276
        %v278 = vsel %vm264, %v275, 0.0
        %v279 = vsel %vm265, %v277, 0.0
        %v280 = vsel %vm225, %v278, 0.0
        %281 = vadd.xlane.f32.xlu0 %v280
        %v282 = vpop.xlane.xlu0 %281
        %v283 = vsel %vm225, %v279, 0.0
        %284 = vadd.xlane.f32.xlu0 %v283
        %v285 = vpop.xlane.xlu0 %284
        %286 = vrot.lane.b32.xlu0 %v212, 96
        %v287 = vpop.permute.xlu0 %286
        %288 = vrot.lane.b32.xlu0 %v215, 96
        %v289 = vpop.permute.xlu0 %288
        %v293 = vsel %vm225, %v278, 0
        %v296 = vsel %vm225, %v279, 0
        %298 = vmatpush.msra.mxu0 0.0
        %299 = vmatpush.msra.mxu0 0.0
        %300 = vmatpush.msra.mxu0 0.0
        %301 = vmatpush.msra.mxu0 0.0
        %302 = vmatpush.msra.mxu0 0.0
        %303 = vmatpush.msra.mxu0 0.0
        %304 = vmatpush.msra.mxu0 0.0
        %305 = vmatpush.msra.mxu0 0.0
        %306 = vmatpush.msra.mxu0 0.0
        %307 = vmatpush.msra.mxu0 0.0
        %308 = vmatpush.msra.mxu0 0.0
        %309 = vmatpush.msra.mxu0 0.0
        %310 = vmatpush.msra.mxu0 0.0
        %311 = vmatpush.msra.mxu0 0.0
        %312 = vmatpush.msra.mxu0 %v289
        %313 = vmatpush.msra.mxu0 %v287
        %314 = vmatmul.f32.gmra.mxu0 %v293
        %v315 = vpop.f32.mrf.mxu0
        %v316 = vadd.f32 0.0, %v315
        %317 = vmatmul.f32.gmra.mxu0 %v296
        %v318 = vpop.f32.mrf.mxu0
        %v319 = vadd.f32 0.0, %v318
        %320 = vdwg.mxu0
        %v321 = vrcp.pop %v282
        %v322 = vmul.f32 %v282, %v321
        %v323 = vsub.f32 1.0, %v322
        %v324 = vmul.f32 %v321, %v323
        %v325 = vadd.f32 %v321, %v324
        %vm326 = vweird.f32 %v282
        %vm327 = vweird.f32 %v321
        %vm328 = vmor %vm326, %vm327
        %v329 = vsel %vm328, %v321, %v325
        %v330 = vand.u32 2147483647, %v282
        %vm331 = vcmp.eq.f32.partialorder %v330, 8.507059e+37
        %v332 = vand.u32 %v282, 2147483648
        %v333 = vor.u32 1.1754944e-38, %v332
        %v334 = vsel %vm331, %v333, %v329
        %v335 = vmul.f32 1.0, %v334
        %v336 = vrcp.pop %v285
        %v337 = vmul.f32 %v285, %v336
        %v338 = vsub.f32 1.0, %v337
        %v339 = vmul.f32 %v336, %v338
        %v340 = vadd.f32 %v336, %v339
        %vm341 = vweird.f32 %v285
        %vm342 = vweird.f32 %v336
        %vm343 = vmor %vm341, %vm342
        %v344 = vsel %vm343, %v336, %v340
        %v345 = vand.u32 2147483647, %v285
        %vm346 = vcmp.eq.f32.partialorder %v345, 8.507059e+37
        %v347 = vand.u32 %v285, 2147483648
        %v348 = vor.u32 1.1754944e-38, %v347
        %v349 = vsel %vm346, %v348, %v344
        %v350 = vmul.f32 1.0, %v349
        %v351 = vmul.f32 %v316, %v335
        %v352 = vmul.f32 %v319, %v350
        %353 = vst.msk [vmem:[%s180] sm:$0xff] %vm225, %v351
        %354 = vst.msk [vmem:[%s180 + $0x8] sm:$0xff] %vm225, %v352
        %s355 = sand.u32 %s75, 1
        %s356 = scalar_lea.sflag [#allocation4], %s355
        %s357 = sand.u32 %s75, 1
        %s358 = smul.addr %s357, 16
        %s359 = scalar_lea.vmem [#allocation7], %s358
        // Predicated region
        $region37: #{tpu_custom_call.1} parent=27 // pred_check
          %p360 = pneg %p85
        $region38: #{tpu_custom_call.1} parent=27 // pred_check_branch
          %362 = sbr.rel (%p360) target = $region40
        $region39: #{tpu_custom_call.1} parent=27 // pred_region
          %364 = vsyncadd %s356, 0
          %s365 = smul.addr %s20, 2
          %s366 = smul.addr %s365, 8
          %s367 = scalar_lea.hbm %s2, %s366
          %s368 = sshll.u32 %s359, 4
          %s369 = int_to_ptr.vmem [resolvable:$true] %s368
          %s370 = sshll.u32 %s367, 4
          %s371 = int_to_ptr.hbm [resolvable:$true] %s370
          %376 = dma.vmem_to_hbm [thread:$0]  %s369, 256, %s371, %s356, 128, 128, 8
        $region40: #{tpu_custom_call.1} parent=27 // pred_fallthru
          _
      $region28: #{tpu_custom_call.1} parent=5 // pred_fallthru
        _
      %p377 = scmp.le.s32.totalorder 2, %s15
      // Predicated region
      $region41: #{tpu_custom_call.1} parent=5 // pred_check
        %p378 = pneg %p377
      $region42: #{tpu_custom_call.1} parent=5 // pred_check_branch
        %380 = sbr.rel (%p378) target = $region44
      $region43: #{tpu_custom_call.1} parent=5 // pred_region
        %s381 = ssub.s32 %s15, 2
        // Predicated region
        $region45: #{tpu_custom_call.1} parent=43 // pred_check
          %p382 = pneg %p91
        $region46: #{tpu_custom_call.1} parent=43 // pred_check_branch
          %384 = sbr.rel (%p382) target = $region48
        $region47: #{tpu_custom_call.1} parent=43 // pred_region
          %s385 = sand.u32 %s76, 1
          %s386 = scalar_lea.sflag [#allocation4], %s385
          %s387 = sand.u32 %s76, 1
          %s388 = smul.addr %s387, 16
          %s389 = scalar_lea.vmem [#allocation7], %s388
          %391 = dma.done %s386, 256
        $region48: #{tpu_custom_call.1} parent=43 // pred_fallthru
          _
      $region44: #{tpu_custom_call.1} parent=5 // pred_fallthru
        _
    $region6: #{tpu_custom_call.1} parent=1 // loop_footer
      %s19 = sadd.s32 1, %s15
    $region7: #{tpu_custom_call.1} parent=1 // loop_footer_branch
      %14 = sbr.rel target = $region3
    $region8: #{tpu_custom_call.1} parent=1 // loop_exit
      _
    %392 = vsyncpa [#allocation3], 1
    %s393 = scalar_lea.sflag [#allocation3], 1
    %394 = vsyncpa %s393, 1
    %395 = vsyncpa [#allocation6], 1
    %396 = vsyncpa [#allocation4], 1
    %s397 = scalar_lea.sflag [#allocation4], 1
    %398 = vsyncpa %s397, 1

</llo_original>
